<compile_context>
chip_gen: v6e
topology: v6e:2x2x1
jax: 0.10.0
libtpu: 0.0.40
codegen_flags: <defaults>
</compile_context>

<pallas_src>
import functools

import jax
import jax.numpy as jnp
from jax.experimental import pallas as pl
from jax.experimental.pallas import tpu as pltpu

LANE = 128          # lane width: output feature dims are padded to multiples of this
SUBLANE = 8         # sublane width: batch tiles are multiples of this
MAX_TILE_B = 1024   # 512-1024-row tiles reach ~85% of HBM roofline; keep per-step overhead small
SPLIT_B = 256       # expose >=2 parallel batch tiles (v7x: 2 TCs) once batch is non-trivial
BF16_BATCH = 1024   # switch MXU inputs to bf16 once the call is HBM-bound (v5e benefits most)


def _round_up(n, m):
    return ((n + m - 1) // m) * m


def _pick_compute_dtype_name(batch):
    # bf16 halves activation/weight DMA bytes at the memory roofline; keep f32
    # at small batch so results match the f32 reference exactly.
    return "bfloat16" if batch >= BF16_BATCH else "float32"


def _choose_batch_tiling(batch):
    """Pick (tile_b, padded_batch): multiple-of-8 tiles, small padding waste,
    and >=2 grid steps for large batches so the "parallel" axis feeds both
    v7x TensorCores."""
    b_p8 = _round_up(batch, SUBLANE)
    n_tiles = max(1, pl.cdiv(b_p8, MAX_TILE_B))
    if n_tiles == 1 and b_p8 >= SPLIT_B:
        n_tiles = 2
    tile_b = _round_up(pl.cdiv(b_p8, n_tiles), SUBLANE)
    return tile_b, n_tiles * tile_b


# ----------------------------------------------------------------------------
# Pallas kernel: fused  y = (...ReLU(x @ W1 + b1)...) @ Wn + bn
# The whole layer chain runs in one kernel body; intermediate activations stay
# in VMEM / vregs and are never written back to HBM.
# ----------------------------------------------------------------------------
def _fused_mlp_kernel(*refs, num_layers, relu_flags, compute_dtype):
    x_ref = refs[0]
    o_ref = refs[-1]
    h = x_ref[...]                                        # [tile_b, d_in]
    for l in range(num_layers):                           # static unroll
        w_ref = refs[1 + 2 * l]
        b_ref = refs[2 + 2 * l]
        # MXU matmul with f32 accumulate; bias add + ReLU are VPU filler.
        h = jnp.dot(h.astype(compute_dtype), w_ref[...],
                    preferred_element_type=jnp.float32)
        h = h + b_ref[...]                                # broadcast (1, D) rows
        if relu_flags[l]:
            h = jnp.maximum(h, 0.0)
    o_ref[...] = h.astype(o_ref.dtype)


# ----------------------------------------------------------------------------
# Jitted wrapper: single fused pallas_call, batch-tiled grid ("parallel").
# The only per-call padding is (optionally) the batch axis of x.
# ----------------------------------------------------------------------------
@functools.partial(
    jax.jit, static_argnames=("relu_flags", "d_out", "compute_dtype_name"))
def _fused_mlp_forward(x, weights_p, biases_p, *, relu_flags, d_out,
                       compute_dtype_name):
    compute_dtype = jnp.dtype(compute_dtype_name)
    num_layers = len(weights_p)
    B, d_in = x.shape
    tile_b, B_p = _choose_batch_tiling(B)

    x = x.astype(compute_dtype)
    if B_p != B:
        # Batch padding only; feature padding lives in the cached weights.
        # Padded rows (zeros) produce bias-only rows that are sliced off below.
        x = jnp.zeros((B_p, d_in), compute_dtype).at[:B].set(x)

    d_last_p = weights_p[-1].shape[1]
    grid = (B_p // tile_b,)

    # Weights/biases use full-array blocks with a constant index_map, so they
    # stay resident in VMEM across all batch tiles.
    in_specs = [pl.BlockSpec((tile_b, d_in), lambda i: (i, 0))]
    for l in range(num_layers):
        in_specs.append(pl.BlockSpec(weights_p[l].shape, lambda i: (0, 0)))
        in_specs.append(pl.BlockSpec(biases_p[l].shape, lambda i: (0, 0)))
    out_specs = pl.BlockSpec((tile_b, d_last_p), lambda i: (i, 0))

    widths = [d_in] + [w.shape[1] for w in weights_p]
    flops = sum(2 * B_p * widths[l] * widths[l + 1] for l in range(num_layers))
    wbytes = sum(int(w.size) * w.dtype.itemsize + int(b.size) * b.dtype.itemsize
                 for w, b in zip(weights_p, biases_p))
    bytes_accessed = (B_p * d_in * compute_dtype.itemsize + wbytes
                      + B_p * d_last_p * 4)

    # Per-tile VMEM estimate: double-buffered in/out tiles + resident weights
    # + widest intermediate activation.  Only override the default scoped
    # limit when needed; never assume more than v7x's 64 MiB physical VMEM.
    vmem_est = int(1.5 * (
        2 * tile_b * d_in * compute_dtype.itemsize
        + 2 * tile_b * d_last_p * 4
        + 2 * wbytes
        + tile_b * max(widths) * 4))
    cp_kwargs = dict(dimension_semantics=("parallel",))
    if vmem_est > (32 << 20):
        cp_kwargs["vmem_limit_bytes"] = min(vmem_est, 64 << 20)

    out_p = pl.pallas_call(
        functools.partial(_fused_mlp_kernel, num_layers=num_layers,
                          relu_flags=relu_flags, compute_dtype=compute_dtype),
        out_shape=jax.ShapeDtypeStruct((B_p, d_last_p), jnp.float32),
        grid=grid,
        in_specs=in_specs,
        out_specs=out_specs,
        compiler_params=pltpu.CompilerParams(**cp_kwargs),
        cost_estimate=pl.CostEstimate(
            flops=flops, transcendentals=0, bytes_accessed=bytes_accessed),
    )(x, *[a for wb in zip(weights_p, biases_p) for a in wb])

    if B_p == B and d_last_p == d_out:
        return out_p
    # TODO(synk): consumers that accept the lane-padded [B, 128] slab could
    # skip this slice entirely (saves one XLA op / HBM round-trip per call).
    return out_p[:B, :d_out]


# ----------------------------------------------------------------------------
# Minimal "layer" objects and the Sequential container (forward-pass only).
# ----------------------------------------------------------------------------
class LinearLayer:
    def __init__(self, w, b, fuse_relu=False):
        self.w = jnp.asarray(w, jnp.float32)                # [d_in, d_out]
        self.b = jnp.asarray(b, jnp.float32).reshape(1, -1)  # [1, d_out]
        self.fuse_relu = fuse_relu
        self._pad_cache = {}   # (in_width, dtype_name) -> (w_padded, b_padded)

    @property
    def d_in(self):
        return self.w.shape[0]

    @property
    def d_out(self):
        return self.w.shape[1]

    def padded_params(self, in_width, compute_dtype_name):
        """Lane-pad W/b ONCE per (input width, dtype) and cache the device
        arrays — no per-forward re-padding (review item 1).  Zero padding is
        exact: padded hidden units get weight 0 / bias 0 -> ReLU 0 -> 0."""
        key = (int(in_width), compute_dtype_name)
        if key not in self._pad_cache:
            dtype = jnp.dtype(compute_dtype_name)
            out_width = _round_up(self.d_out, LANE)
            w_p = (jnp.zeros((in_width, out_width), dtype)
                   .at[: self.d_in, : self.d_out].set(self.w.astype(dtype)))
            b_p = (jnp.zeros((1, out_width), jnp.float32)
                   .at[:, : self.d_out].set(self.b))
            self._pad_cache[key] = (w_p, b_p)
        return self._pad_cache[key]

    def forward(self, x):
        # Standalone path: single-layer fused kernel.
        dt_name = _pick_compute_dtype_name(x.shape[0])
        w_p, b_p = self.padded_params(self.d_in, dt_name)
        return _fused_mlp_forward(
            x, (w_p,), (b_p,), relu_flags=(self.fuse_relu,),
            d_out=self.d_out, compute_dtype_name=dt_name)


class ReLULayer:
    def forward(self, x):
        return jnp.maximum(x, 0.0)


class Sequential:
    """JAX/Pallas equivalent of the PyTorch Sequential container.

    forward() keeps the `for layer in layers: x = layer.forward(x)` semantics,
    but when the stack is made of Linear(+ReLU) layers it fuses the whole
    chain into ONE pallas_call (activations stay in VMEM between layers).
    """

    def __init__(self, layers=None):
        self.layers = layers if layers is not None else []

    def add(self, layer):
        self.layers.append(layer)

    def _try_fuse(self):
        linears, relu_flags = [], []
        for layer in self.layers:
            if isinstance(layer, LinearLayer):
                linears.append(layer)
                relu_flags.append(layer.fuse_relu)
            elif isinstance(layer, ReLULayer):
                if not relu_flags:
                    return None
                relu_flags[-1] = True
            else:
                return None  # unsupported layer type -> no full fusion
        if not linears:
            return None
        return linears, relu_flags

    def forward(self, x):
        plan = self._try_fuse()
        if plan is not None:
            linears, relu_flags = plan
            dt_name = _pick_compute_dtype_name(x.shape[0])
            weights_p, biases_p = [], []
            in_width = linears[0].d_in            # raw x features for layer 0
            for lyr in linears:
                w_p, b_p = lyr.padded_params(in_width, dt_name)  # cached
                weights_p.append(w_p)
                biases_p.append(b_p)
                in_width = _round_up(lyr.d_out, LANE)
            return _fused_mlp_forward(
                x, tuple(weights_p), tuple(biases_p),
                relu_flags=tuple(relu_flags),
                d_out=linears[-1].d_out,
                compute_dtype_name=dt_name)
        # Fallback: layer-by-layer, mirroring the reference container.
        for layer in self.layers:
            x = layer.forward(x)
        return x

    # TODO(synk): backward()/get_params()/train()/eval()/device-movement of the
    # reference module are container bookkeeping delegating to per-layer
    # implementations not part of this module; only forward() is implemented.


# ----------------------------------------------------------------------------
# Deterministic parameter init + reference check
# ----------------------------------------------------------------------------
def make_params(key, din, dout):
    kw, kb = jax.random.split(key)
    scale = 1.0 / jnp.sqrt(jnp.float32(din))
    w = jax.random.uniform(kw, (din, dout), jnp.float32, -scale, scale)
    b = jax.random.uniform(kb, (1, dout), jnp.float32, -scale, scale)
    return w, b


if __name__ == "__main__":
    key = jax.random.PRNGKey(0)
    k_x, k_l1, k_l2 = jax.random.split(key, 3)

    batch, d_in, d_hidden, d_out = 8, 32, 64, 16
    x = jax.random.normal(k_x, (batch, d_in), jnp.float32)

    w1, b1 = make_params(k_l1, d_in, d_hidden)
    w2, b2 = make_params(k_l2, d_hidden, d_out)

    model = Sequential()
    model.add(LinearLayer(w1, b1))    # Linear
    model.add(ReLULayer())            # ReLU (folded into previous Linear)
    model.add(LinearLayer(w2, b2))    # Linear

    out = model.forward(x)            # ONE fused pallas_call under jax.jit
    out = jax.block_until_ready(out)

    # Pure-JAX reference for correctness (f32 compute path at this batch size).
    ref = jnp.maximum(x @ w1 + b1, 0.0) @ w2 + b2
    assert out.shape == (batch, d_out)
    assert jnp.allclose(out, ref, atol=1e-5, rtol=1e-5)

    # Second call: cached padded weights are reused, no re-padding ops.
    out2 = jax.block_until_ready(model.forward(x))
    assert jnp.allclose(out2, ref, atol=1e-5, rtol=1e-5)

    print("KERNEL_OK")
</pallas_src>

<mosaic_0001>
module attributes {stable_mosaic.version = 11 : i64} {
  func.func @_fused_mlp_kernel(%arg0: i32, %arg1: memref<8x32xf32, #tpu.memory_space<vmem>>, %arg2: memref<32x128xf32, #tpu.memory_space<vmem>>, %arg3: memref<1x128xf32, #tpu.memory_space<vmem>>, %arg4: memref<128x128xf32, #tpu.memory_space<vmem>>, %arg5: memref<1x128xf32, #tpu.memory_space<vmem>>, %arg6: memref<8x128xf32, #tpu.memory_space<vmem>>) attributes {dimension_semantics = [#tpu.dimension_semantics<parallel>], iteration_bounds = array<i64: 1>, scalar_prefetch = 0 : i64, scratch_operands = 0 : i64, tpu.core_type = #tpu.core_type<tc>, window_params = [{transform_indices = @transform_0, window_bounds = array<i64: 8, 32>}, {pipeline_mode = #tpu.pipeline_mode<synchronous>, transform_indices = @transform_1, window_bounds = array<i64: 32, 128>}, {pipeline_mode = #tpu.pipeline_mode<synchronous>, transform_indices = @transform_2, window_bounds = array<i64: 1, 128>}, {pipeline_mode = #tpu.pipeline_mode<synchronous>, transform_indices = @transform_3, window_bounds = array<i64: 128, 128>}, {pipeline_mode = #tpu.pipeline_mode<synchronous>, transform_indices = @transform_4, window_bounds = array<i64: 1, 128>}, {transform_indices = @transform_5, window_bounds = array<i64: 8, 128>}]} {
    %c0 = arith.constant 0 : index
    %c0_0 = arith.constant 0 : index
    %0 = vector.load %arg1[%c0, %c0_0] : memref<8x32xf32, #tpu.memory_space<vmem>>, vector<8x32xf32>
    %c0_1 = arith.constant 0 : index
    %c0_2 = arith.constant 0 : index
    %1 = vector.load %arg2[%c0_1, %c0_2] : memref<32x128xf32, #tpu.memory_space<vmem>>, vector<32x128xf32>
    %cst = arith.constant dense<0.000000e+00> : vector<8x128xf32>
    %2 = tpu.matmul %0, %1, %cst {dimension_numbers = #tpu.dot_dimension_numbers<[1], [0], [0], [1], [0, 0, 1, 1], [], []>} : vector<8x32xf32>, vector<32x128xf32>, vector<8x128xf32> -> vector<8x128xf32>
    %c0_3 = arith.constant 0 : index
    %c0_4 = arith.constant 0 : index
    %3 = vector.load %arg3[%c0_3, %c0_4] : memref<1x128xf32, #tpu.memory_space<vmem>>, vector<1x128xf32>
    %4 = vector.broadcast %3 : vector<1x128xf32> to vector<8x128xf32>
    %5 = arith.addf %2, %4 : vector<8x128xf32>
    %cst_5 = arith.constant 0.000000e+00 : f32
    %6 = vector.broadcast %cst_5 : f32 to vector<8x128xf32>
    %7 = arith.maximumf %5, %6 : vector<8x128xf32>
    %c0_6 = arith.constant 0 : index
    %c0_7 = arith.constant 0 : index
    %8 = vector.load %arg4[%c0_6, %c0_7] : memref<128x128xf32, #tpu.memory_space<vmem>>, vector<128x128xf32>
    %cst_8 = arith.constant dense<0.000000e+00> : vector<8x128xf32>
    %9 = tpu.matmul %7, %8, %cst_8 {dimension_numbers = #tpu.dot_dimension_numbers<[1], [0], [0], [1], [0, 0, 1, 1], [], []>} : vector<8x128xf32>, vector<128x128xf32>, vector<8x128xf32> -> vector<8x128xf32>
    %c0_9 = arith.constant 0 : index
    %c0_10 = arith.constant 0 : index
    %10 = vector.load %arg5[%c0_9, %c0_10] : memref<1x128xf32, #tpu.memory_space<vmem>>, vector<1x128xf32>
    %11 = vector.broadcast %10 : vector<1x128xf32> to vector<8x128xf32>
    %12 = arith.addf %9, %11 : vector<8x128xf32>
    %c0_11 = arith.constant 0 : index
    %c0_12 = arith.constant 0 : index
    %13 = vector.load %arg6[%c0_11, %c0_12] : memref<8x128xf32, #tpu.memory_space<vmem>>, vector<8x128xf32>
    tpu.vector_store %arg6[%c0_11, %c0_12], %12 {strides = array<i32>} : memref<8x128xf32, #tpu.memory_space<vmem>>, vector<8x128xf32>,
    return
  }
  func.func @transform_0(%arg0: i32) -> (i32, i32) {
    %c0_i32 = arith.constant 0 : i32
    %c0_i32_0 = arith.constant 0 : i32
    return %arg0, %c0_i32 : i32, i32
  }
  func.func @transform_1(%arg0: i32) -> (i32, i32) {
    %c0_i32 = arith.constant 0 : i32
    %c0_i32_0 = arith.constant 0 : i32
    %c0_i32_1 = arith.constant 0 : i32
    return %c0_i32, %c0_i32_0 : i32, i32
  }
  func.func @transform_2(%arg0: i32) -> (i32, i32) {
    %c0_i32 = arith.constant 0 : i32
    %c0_i32_0 = arith.constant 0 : i32
    %c0_i32_1 = arith.constant 0 : i32
    return %c0_i32, %c0_i32_0 : i32, i32
  }
  func.func @transform_3(%arg0: i32) -> (i32, i32) {
    %c0_i32 = arith.constant 0 : i32
    %c0_i32_0 = arith.constant 0 : i32
    %c0_i32_1 = arith.constant 0 : i32
    return %c0_i32, %c0_i32_0 : i32, i32
  }
  func.func @transform_4(%arg0: i32) -> (i32, i32) {
    %c0_i32 = arith.constant 0 : i32
    %c0_i32_0 = arith.constant 0 : i32
    %c0_i32_1 = arith.constant 0 : i32
    return %c0_i32, %c0_i32_0 : i32, i32
  }
  func.func @transform_5(%arg0: i32) -> (i32, i32) {
    %c0_i32 = arith.constant 0 : i32
    %c0_i32_0 = arith.constant 0 : i32
    return %arg0, %c0_i32 : i32, i32
  }
}

</mosaic_0001>

<llo_original>
// kernel: _fused_mlp_forward.1
$region0: #{_fused_mlp_forward.1}
  #allocation0 [shape = 'u32[]', space=smem, size = 0x4, offset = 0x4, fixed_abs, tag = 'smem constant byte address 0x4 - core index']
  #allocation1 [shape = 'u32[144,128]{1,0:T(1,128)}', space=vmem, size = 0x12000, scoped, tag = 'internal scratch']
  %s0 = inlined_call_operand.hbm [shape: f32[8,32], index: 0, kind: input, shape index: {}]
  %s1 = inlined_call_operand.hbm [shape: f32[32,128], index: 1, kind: input, shape index: {}]
  %s2 = inlined_call_operand.vmem [shape: f32[1,128], index: 2, kind: input, shape index: {}]
  %s3 = inlined_call_operand.hbm [shape: f32[128,128], index: 3, kind: input, shape index: {}]
  %s4 = inlined_call_operand.vmem [shape: f32[1,128], index: 4, kind: input, shape index: {}]
  %s5 = inlined_call_operand.hbm [shape: f32[8,128], index: 5, kind: output, shape index: {}]
  %s6 = sld [smem:[#allocation0]]
  $region42: #{_fused_mlp_forward.1} parent=0
    _
  %s8 = ssub.s32 1, %s6
  %s9 = scalar_select 0, %s8, %s6
  $region1: #{_fused_mlp_forward.1} parent=0
    #allocation2 [shape = 'u8[4096]{0}', space=vmem, size = 0x1000, scoped, tag = 'input window, operand 0, single buffered']
    #allocation3 [shape = 's32[1]{0}', space=sflag, size = 0x4, scoped, tag = 'scoped memory for _fused_mlp_forward.1']
    #allocation4 [shape = 's32[1]{0}', space=sflag, size = 0x4, scoped, tag = 'scoped memory for _fused_mlp_forward.1']
    #allocation5 [shape = 'u8[16384]{0}', space=vmem, size = 0x4000, scoped, tag = 'input window, operand 1, single buffered']
    #allocation6 [shape = 's32[1]{0}', space=sflag, size = 0x4, scoped, tag = 'scoped memory for _fused_mlp_forward.1']
    #allocation7 [shape = 'u8[65536]{0}', space=vmem, size = 0x10000, scoped, tag = 'input window, operand 3, single buffered']
    #allocation8 [shape = 'u8[4096]{0}', space=vmem, size = 0x1000, scoped, tag = 'output window, operand 0, single buffered']
    %10 = vsyncpa [#allocation3], 0
    %11 = vsyncpa [#allocation6], 0
    %12 = vsyncpa [#allocation4], 0
    // Predicated region
    $region2: #{_fused_mlp_forward.1} parent=1 // pred_check
      _
    $region3: #{_fused_mlp_forward.1} parent=1 // pred_check_branch
      %14 = sbr.rel (0) target = $region5
    $region4: #{_fused_mlp_forward.1} parent=1 // pred_region
      %s16 = ssub.s32 128, 128
      %17 = vsyncadd [#allocation3], %s16
      %s19 = sshll.u32 [#allocation2], 4
      %s20 = int_to_ptr.vmem [resolvable:$true] %s19
      %22 = dma.hbm_to_vmem [thread:$0]  %s0, 128, %s20, [#allocation3]
    $region5: #{_fused_mlp_forward.1} parent=1 // pred_fallthru
      _
    // Predicated region
    $region6: #{_fused_mlp_forward.1} parent=1 // pred_check
      _
    $region7: #{_fused_mlp_forward.1} parent=1 // pred_check_branch
      %24 = sbr.rel (0) target = $region9
    $region8: #{_fused_mlp_forward.1} parent=1 // pred_region
      %s26 = ssub.s32 512, 512
      %27 = vsyncadd [#allocation6], %s26
      %s28 = sshll.u32 [#allocation5], 4
      %s29 = int_to_ptr.vmem [resolvable:$true] %s28
      %34 = dma.hbm_to_vmem [thread:$0]  %s1, 512, %s29, [#allocation6], 128, 128, 8
    $region9: #{_fused_mlp_forward.1} parent=1 // pred_fallthru
      _
    // Predicated region
    $region10: #{_fused_mlp_forward.1} parent=1 // pred_check
      _
    $region11: #{_fused_mlp_forward.1} parent=1 // pred_check_branch
      %36 = sbr.rel (0) target = $region13
    $region12: #{_fused_mlp_forward.1} parent=1 // pred_region
      _
    $region13: #{_fused_mlp_forward.1} parent=1 // pred_fallthru
      _
    // Predicated region
    $region14: #{_fused_mlp_forward.1} parent=1 // pred_check
      _
    $region15: #{_fused_mlp_forward.1} parent=1 // pred_check_branch
      %38 = sbr.rel (0) target = $region17
    $region16: #{_fused_mlp_forward.1} parent=1 // pred_region
      %s40 = ssub.s32 2048, 2048
      %41 = vsyncadd [#allocation6], %s40
      %s42 = sshll.u32 [#allocation7], 4
      %s43 = int_to_ptr.vmem [resolvable:$true] %s42
      %48 = dma.hbm_to_vmem [thread:$0]  %s3, 2048, %s43, [#allocation6], 128, 128, 8
    $region17: #{_fused_mlp_forward.1} parent=1 // pred_fallthru
      _
    // Predicated region
    $region18: #{_fused_mlp_forward.1} parent=1 // pred_check
      _
    $region19: #{_fused_mlp_forward.1} parent=1 // pred_check_branch
      %50 = sbr.rel (0) target = $region21
    $region20: #{_fused_mlp_forward.1} parent=1 // pred_region
      _
    $region21: #{_fused_mlp_forward.1} parent=1 // pred_fallthru
      _
    // Predicated region
    $region22: #{_fused_mlp_forward.1} parent=1 // pred_check
      _
    $region23: #{_fused_mlp_forward.1} parent=1 // pred_check_branch
      %52 = sbr.rel (0) target = $region25
    $region24: #{_fused_mlp_forward.1} parent=1 // pred_region
      %53 = dma.done [#allocation3], 128
    $region25: #{_fused_mlp_forward.1} parent=1 // pred_fallthru
      _
    // Predicated region
    $region26: #{_fused_mlp_forward.1} parent=1 // pred_check
      _
    $region27: #{_fused_mlp_forward.1} parent=1 // pred_check_branch
      %55 = sbr.rel (0) target = $region29
    $region28: #{_fused_mlp_forward.1} parent=1 // pred_region
      %56 = dma.done [#allocation6], 512
    $region29: #{_fused_mlp_forward.1} parent=1 // pred_fallthru
      _
    // Predicated region
    $region30: #{_fused_mlp_forward.1} parent=1 // pred_check
      _
    $region31: #{_fused_mlp_forward.1} parent=1 // pred_check_branch
      %58 = sbr.rel (0) target = $region33
    $region32: #{_fused_mlp_forward.1} parent=1 // pred_region
      %59 = dma.done [#allocation6], 2048
    $region33: #{_fused_mlp_forward.1} parent=1 // pred_fallthru
      _
    %v60 = vld [vmem:[#allocation2] sm:$0xff]
    %v61 = vld [vmem:[#allocation5] sm:$0xff]
    %v62 = vld [vmem:[#allocation5 + $0x8] sm:$0xff]
    %v63 = vld [vmem:[#allocation5 + $0x10] sm:$0xff]
    %v64 = vld [vmem:[#allocation5 + $0x18] sm:$0xff]
    %v65 = vld [vmem:[%s2] sm:$0x1]
    %v67 = vlaneseq
    %v68 = vshrl.u32 %v67, 7
    %v69 = vsub.s32 0, %v68
    %v70 = vrot.slane %v65, %v69
    %vm72 = vcmask 261120
    %v74 = vsel %vm72, %v60, 0
    %76 = vmatprep.subr.mxu0 0.0
    %77 = vmatpush1.msra.mxu0 0.0
    %78 = vmatprep.subr.mxu0 0.0
    %79 = vmatpush1.msra.mxu0 0.0
    %80 = vmatprep.subr.mxu0 0.0
    %81 = vmatpush1.msra.mxu0 0.0
    %82 = vmatprep.subr.mxu0 0.0
    %83 = vmatpush1.msra.mxu0 0.0
    %84 = vmatprep.subr.mxu0 0.0
    %85 = vmatpush1.msra.mxu0 0.0
    %86 = vmatprep.subr.mxu0 0.0
    %87 = vmatpush1.msra.mxu0 0.0
    %88 = vmatprep.subr.mxu0 0.0
    %89 = vmatpush1.msra.mxu0 0.0
    %90 = vmatprep.subr.mxu0 0.0
    %91 = vmatpush1.msra.mxu0 0.0
    %92 = vmatprep.subr.mxu0 0.0
    %93 = vmatpush1.msra.mxu0 0.0
    %94 = vmatprep.subr.mxu0 0.0
    %95 = vmatpush1.msra.mxu0 0.0
    %96 = vmatprep.subr.mxu0 0.0
    %97 = vmatpush1.msra.mxu0 0.0
    %98 = vmatprep.subr.mxu0 0.0
    %99 = vmatpush1.msra.mxu0 0.0
    %100 = vmatprep.subr.mxu0 0.0
    %101 = vmatpush1.msra.mxu0 %v64
    %102 = vmatprep.subr.mxu0 0.0
    %103 = vmatpush1.msra.mxu0 %v63
    %104 = vmatprep.subr.mxu0 0.0
    %105 = vmatpush1.msra.mxu0 %v62
    %106 = vmatprep.subr.mxu0 0.0
    %107 = vmatpush1.msra.mxu0 %v61
    %108 = vmatprep.subr.mxu0 0.0
    %109 = vmatpush2.msra.mxu0 0.0
    %110 = vmatprep.subr.mxu0 0.0
    %111 = vmatpush2.msra.mxu0 0.0
    %112 = vmatprep.subr.mxu0 0.0
    %113 = vmatpush2.msra.mxu0 0.0
    %114 = vmatprep.subr.mxu0 0.0
    %115 = vmatpush2.msra.mxu0 0.0
    %116 = vmatprep.subr.mxu0 0.0
    %117 = vmatpush2.msra.mxu0 0.0
    %118 = vmatprep.subr.mxu0 0.0
    %119 = vmatpush2.msra.mxu0 0.0
    %120 = vmatprep.subr.mxu0 0.0
    %121 = vmatpush2.msra.mxu0 0.0
    %122 = vmatprep.subr.mxu0 0.0
    %123 = vmatpush2.msra.mxu0 0.0
    %124 = vmatprep.subr.mxu0 0.0
    %125 = vmatpush2.msra.mxu0 0.0
    %126 = vmatprep.subr.mxu0 0.0
    %127 = vmatpush2.msra.mxu0 0.0
    %128 = vmatprep.subr.mxu0 0.0
    %129 = vmatpush2.msra.mxu0 0.0
    %130 = vmatprep.subr.mxu0 0.0
    %131 = vmatpush2.msra.mxu0 0.0
    %132 = vmatprep.subr.mxu0 0.0
    %133 = vmatpush2.msra.mxu0 0.0
    %134 = vmatprep.subr.mxu0 0.0
    %135 = vmatpush2.msra.mxu0 0.0
    %136 = vmatprep.subr.mxu0 0.0
    %137 = vmatpush2.msra.mxu0 0.0
    %138 = vmatprep.subr.mxu0 0.0
    %139 = vmatpush2.msra.mxu0 0.0
    %140 = vmatprep.mubr.f32.mxu0 0.0
    %141 = vmatmul.mubr.f32.gmra.mxu0 %v74
    %v142 = vpop.f32.mrf.mxu0
    %v143 = vadd.f32 %v70, %v142
    %v144 = vpop.f32.mrf.mxu0
    %145 = vdwg.mxu0
    %v146 = vmax.f32 %v143, 0.0
    %v147 = vld [vmem:[#allocation7] sm:$0xff]
    %v148 = vld [vmem:[#allocation7 + $0x8] sm:$0xff]
    %v149 = vld [vmem:[#allocation7 + $0x10] sm:$0xff]
    %v150 = vld [vmem:[#allocation7 + $0x18] sm:$0xff]
    %v151 = vld [vmem:[#allocation7 + $0x20] sm:$0xff]
    %v152 = vld [vmem:[#allocation7 + $0x28] sm:$0xff]
    %v153 = vld [vmem:[#allocation7 + $0x30] sm:$0xff]
    %v154 = vld [vmem:[#allocation7 + $0x38] sm:$0xff]
    %v155 = vld [vmem:[#allocation7 + $0x40] sm:$0xff]
    %v156 = vld [vmem:[#allocation7 + $0x48] sm:$0xff]
    %v157 = vld [vmem:[#allocation7 + $0x50] sm:$0xff]
    %v158 = vld [vmem:[#allocation7 + $0x58] sm:$0xff]
    %v159 = vld [vmem:[#allocation7 + $0x60] sm:$0xff]
    %v160 = vld [vmem:[#allocation7 + $0x68] sm:$0xff]
    %v161 = vld [vmem:[#allocation7 + $0x70] sm:$0xff]
    %v162 = vld [vmem:[#allocation7 + $0x78] sm:$0xff]
    %v163 = vld [vmem:[%s4] sm:$0x1]
    %v165 = vlaneseq
    %v166 = vshrl.u32 %v165, 7
    %v167 = vsub.s32 0, %v166
    %v168 = vrot.slane %v163, %v167
    %170 = vmatprep.subr.mxu0 0.0
    %171 = vmatpush1.msra.mxu0 %v162
    %172 = vmatprep.subr.mxu0 0.0
    %173 = vmatpush1.msra.mxu0 %v161
    %174 = vmatprep.subr.mxu0 0.0
    %175 = vmatpush1.msra.mxu0 %v160
    %176 = vmatprep.subr.mxu0 0.0
    %177 = vmatpush1.msra.mxu0 %v159
    %178 = vmatprep.subr.mxu0 0.0
    %179 = vmatpush1.msra.mxu0 %v158
    %180 = vmatprep.subr.mxu0 0.0
    %181 = vmatpush1.msra.mxu0 %v157
    %182 = vmatprep.subr.mxu0 0.0
    %183 = vmatpush1.msra.mxu0 %v156
    %184 = vmatprep.subr.mxu0 0.0
    %185 = vmatpush1.msra.mxu0 %v155
    %186 = vmatprep.subr.mxu0 0.0
    %187 = vmatpush1.msra.mxu0 %v154
    %188 = vmatprep.subr.mxu0 0.0
    %189 = vmatpush1.msra.mxu0 %v153
    %190 = vmatprep.subr.mxu0 0.0
    %191 = vmatpush1.msra.mxu0 %v152
    %192 = vmatprep.subr.mxu0 0.0
    %193 = vmatpush1.msra.mxu0 %v151
    %194 = vmatprep.subr.mxu0 0.0
    %195 = vmatpush1.msra.mxu0 %v150
    %196 = vmatprep.subr.mxu0 0.0
    %197 = vmatpush1.msra.mxu0 %v149
    %198 = vmatprep.subr.mxu0 0.0
    %199 = vmatpush1.msra.mxu0 %v148
    %200 = vmatprep.subr.mxu0 0.0
    %201 = vmatpush1.msra.mxu0 %v147
    %202 = vmatprep.subr.mxu0 0.0
    %203 = vmatpush2.msra.mxu0 0.0
    %204 = vmatprep.subr.mxu0 0.0
    %205 = vmatpush2.msra.mxu0 0.0
    %206 = vmatprep.subr.mxu0 0.0
    %207 = vmatpush2.msra.mxu0 0.0
    %208 = vmatprep.subr.mxu0 0.0
    %209 = vmatpush2.msra.mxu0 0.0
    %210 = vmatprep.subr.mxu0 0.0
    %211 = vmatpush2.msra.mxu0 0.0
    %212 = vmatprep.subr.mxu0 0.0
    %213 = vmatpush2.msra.mxu0 0.0
    %214 = vmatprep.subr.mxu0 0.0
    %215 = vmatpush2.msra.mxu0 0.0
    %216 = vmatprep.subr.mxu0 0.0
    %217 = vmatpush2.msra.mxu0 0.0
    %218 = vmatprep.subr.mxu0 0.0
    %219 = vmatpush2.msra.mxu0 0.0
    %220 = vmatprep.subr.mxu0 0.0
    %221 = vmatpush2.msra.mxu0 0.0
    %222 = vmatprep.subr.mxu0 0.0
    %223 = vmatpush2.msra.mxu0 0.0
    %224 = vmatprep.subr.mxu0 0.0
    %225 = vmatpush2.msra.mxu0 0.0
    %226 = vmatprep.subr.mxu0 0.0
    %227 = vmatpush2.msra.mxu0 0.0
    %228 = vmatprep.subr.mxu0 0.0
    %229 = vmatpush2.msra.mxu0 0.0
    %230 = vmatprep.subr.mxu0 0.0
    %231 = vmatpush2.msra.mxu0 0.0
    %232 = vmatprep.subr.mxu0 0.0
    %233 = vmatpush2.msra.mxu0 0.0
    %234 = vmatprep.mubr.f32.mxu0 0.0
    %235 = vmatmul.mubr.f32.gmra.mxu0 %v146
    %v236 = vpop.f32.mrf.mxu0
    %v237 = vadd.f32 %v168, %v236
    %v238 = vpop.f32.mrf.mxu0
    %239 = vdwg.mxu0
    %240 = vst [vmem:[#allocation8] sm:$0xff] %v237
    // Predicated region
    $region34: #{_fused_mlp_forward.1} parent=1 // pred_check
      _
    $region35: #{_fused_mlp_forward.1} parent=1 // pred_check_branch
      %242 = sbr.rel (0) target = $region37
    $region36: #{_fused_mlp_forward.1} parent=1 // pred_region
      %s244 = ssub.s32 128, 128
      %245 = vsyncadd [#allocation4], %s244
      %s247 = sshll.u32 [#allocation8], 4
      %s248 = int_to_ptr.vmem [resolvable:$true] %s247
      %250 = dma.vmem_to_hbm [thread:$0]  %s248, 128, %s5, [#allocation4]
    $region37: #{_fused_mlp_forward.1} parent=1 // pred_fallthru
      _
    // Predicated region
    $region38: #{_fused_mlp_forward.1} parent=1 // pred_check
      _
    $region39: #{_fused_mlp_forward.1} parent=1 // pred_check_branch
      %252 = sbr.rel (0) target = $region41
    $region40: #{_fused_mlp_forward.1} parent=1 // pred_region
      %253 = dma.done [#allocation4], 128
    $region41: #{_fused_mlp_forward.1} parent=1 // pred_fallthru
      _
    %254 = vsyncpa [#allocation3], 1
    %255 = vsyncpa [#allocation6], 1
    %256 = vsyncpa [#allocation4], 1

</llo_original>
